<compile_context>
chip_gen: v6e
topology: v6e:2x2x1
jax: 0.10.0
libtpu: 0.0.40
codegen_flags: <defaults>
</compile_context>

<pallas_src>
import math
from functools import partial
from typing import List, Tuple, Union

import numpy as np
import jax
import jax.numpy as jnp
from jax.experimental import pallas as pl
from jax.experimental.pallas import tpu as pltpu


def make_ntuple(x: Union[int, List[int], Tuple[int, ...]], ndim: int) -> Tuple[int, ...]:
    if isinstance(x, int):
        return (x,) * ndim
    t = tuple(x)
    assert len(t) == ndim
    return t


def _round_up(x: int, m: int) -> int:
    return ((x + m - 1) // m) * m


def _pick_tile(n: int, requested: int = 2048, floor: int = 256) -> int:
    """Point-tile size: large enough to amortize ~0.35us/step overhead, but
    keeping >=2 grid steps when possible so v7x's two TensorCores both work."""
    if n <= floor:
        return floor
    half = _round_up((n + 1) // 2, floor)
    return max(8, min(requested, half))


# ----------------------------------------------------------------------------
# Pallas kernel: one fused MXU matmul (+ bias) per point tile.
#   G: [Npad, Kc_pad] bf16 (gathered neighbor features, K-fused, zero-padded)
#   W: [Kc_pad, Cout_pad] bf16 (resident in VMEM across all tiles)
#   B: [1, Cout_pad] f32
#   O: [Npad, Cout_pad] bf16 (f32 accumulation)
# ----------------------------------------------------------------------------
def _sparse_conv_kernel(g_ref, w_ref, b_ref, o_ref):
    acc = jnp.dot(g_ref[...], w_ref[...], preferred_element_type=jnp.float32)
    o_ref[...] = (acc + b_ref[...]).astype(o_ref.dtype)


def sparse_conv3d_matmul(gathered: jax.Array, weights: jax.Array,
                         bias_row: jax.Array, *, tn: int,
                         out_dtype=jnp.bfloat16) -> jax.Array:
    """gathered: [Npad, Kc_pad] bf16, weights: [Kc_pad, Cout_pad] bf16,
    bias_row: [1, Cout_pad] f32  ->  [Npad, Cout_pad] out_dtype."""
    npad, kc_pad = gathered.shape
    kc_w, cout_pad = weights.shape
    assert kc_pad == kc_w
    assert npad % tn == 0, "pad point count to a multiple of the tile size"

    out_itemsize = np.dtype(out_dtype).itemsize
    flops = 2 * npad * kc_pad * cout_pad
    bytes_accessed = (npad * kc_pad * gathered.dtype.itemsize
                      + kc_pad * cout_pad * weights.dtype.itemsize
                      + cout_pad * bias_row.dtype.itemsize
                      + npad * cout_pad * out_itemsize)
    # Double-buffer budget (G, O pipelined; W/B constant-indexed but Pallas
    # still allocates 2 buffers by default).  Capped at 64 MiB for v7x VMEM.
    vmem_need = (2 * tn * kc_pad * gathered.dtype.itemsize
                 + 2 * tn * cout_pad * out_itemsize
                 + 2 * kc_pad * cout_pad * weights.dtype.itemsize
                 + 2 * 8 * cout_pad * bias_row.dtype.itemsize)
    vmem_limit = int(min(max(2 * vmem_need + (4 << 20), 32 << 20), 64 << 20))

    return pl.pallas_call(
        _sparse_conv_kernel,
        out_shape=jax.ShapeDtypeStruct((npad, cout_pad), out_dtype),
        grid_spec=pltpu.PrefetchScalarGridSpec(
            num_scalar_prefetch=0,
            grid=(npad // tn,),
            in_specs=[
                pl.BlockSpec((tn, kc_pad), lambda i: (i, 0)),
                # Constant block index => weights DMA'd into VMEM once and stay
                # resident across all point tiles.
                # (pipeline_mode=pl.Buffered(1) would drop the spare buffer; the
                #  weight block is tiny here so we keep the default for safety.)
                pl.BlockSpec((kc_pad, cout_pad), lambda i: (0, 0)),
                pl.BlockSpec((1, cout_pad), lambda i: (0, 0)),
            ],
            out_specs=pl.BlockSpec((tn, cout_pad), lambda i: (i, 0)),
        ),
        compiler_params=pltpu.CompilerParams(
            dimension_semantics=("parallel",),
            vmem_limit_bytes=vmem_limit),
        cost_estimate=pl.CostEstimate(flops=flops, transcendentals=0,
                                      bytes_accessed=bytes_accessed),
    )(gathered, weights, bias_row)


@partial(jax.jit, static_argnames=("tn", "out_dtype"))
def _gather_matmul(feats_src: jax.Array, idx_pad: jax.Array, weights: jax.Array,
                   bias_row: jax.Array, *, tn: int, out_dtype) -> jax.Array:
    """Fused glue: bf16 gather -> [Npad, Kc_pad] -> single Pallas matmul."""
    npad, k_eff = idx_pad.shape
    cin = feats_src.shape[1]
    kc_pad = weights.shape[0]
    g = jnp.take(feats_src, idx_pad, axis=0).reshape(npad, k_eff * cin)
    if k_eff * cin != kc_pad:  # only when Cin does not divide the 128-padding
        g = jnp.pad(g, ((0, 0), (0, kc_pad - k_eff * cin)))
    return sparse_conv3d_matmul(g, weights, bias_row, tn=tn, out_dtype=out_dtype)


# ----------------------------------------------------------------------------
# Module equivalent
# ----------------------------------------------------------------------------
class Conv3dPallas:
    def __init__(self, in_channels: int, out_channels: int,
                 kernel_size: Union[int, List[int], Tuple[int, ...]] = 3,
                 stride: Union[int, List[int], Tuple[int, ...]] = 1,
                 dilation: int = 1, bias: bool = False, *, key,
                 out_dtype=jnp.bfloat16):
        self.in_channels = in_channels
        self.out_channels = out_channels
        self.kernel_size = make_ntuple(kernel_size, 3)
        self.stride = make_ntuple(stride, 3)
        self.dilation = dilation
        self.kernel_volume = int(np.prod(self.kernel_size))
        self.out_dtype = out_dtype

        # reset_parameters(): uniform(-std, std), std = 1/sqrt(Cin * Kvol)
        std = 1.0 / math.sqrt(in_channels * self.kernel_volume)
        k_w, k_b = jax.random.split(key)
        if self.kernel_volume > 1:
            shape = (self.kernel_volume, in_channels, out_channels)
        else:
            shape = (in_channels, out_channels)
        self.kernel = jax.random.uniform(k_w, shape, jnp.float32,
                                         minval=-std, maxval=std)
        self.bias = (jax.random.uniform(k_b, (out_channels,), jnp.float32,
                                        minval=-std, maxval=std)
                     if bias else None)

    # ---- host-side kernel map (hashmap kmap_mode equivalent), vectorized ----
    def _build_kmap(self, coords_np: np.ndarray) -> np.ndarray:
        coords = np.asarray(coords_np, dtype=np.int64)          # [N, 4]
        N = coords.shape[0]
        kx, ky, kz = self.kernel_size
        d = self.dilation
        offs = np.array(
            [[0, (ox - kx // 2) * d, (oy - ky // 2) * d, (oz - kz // 2) * d]
             for ox in range(kx) for oy in range(ky) for oz in range(kz)],
            dtype=np.int64)                                      # [K, 4]

        mins = coords.min(axis=0)
        maxs = coords.max(axis=0)
        lo = mins + offs.min(axis=0)
        span = maxs + offs.max(axis=0) - lo + 1                  # per-axis extent

        def encode(c):
            s = c - lo
            return ((s[:, 0] * span[1] + s[:, 1]) * span[2] + s[:, 2]) * span[3] + s[:, 3]

        keys = encode(coords)                                    # unique per voxel
        order = np.argsort(keys, kind="stable")
        skeys = keys[order]

        idx_map = np.full((self.kernel_volume, N), N, dtype=np.int32)  # N = miss
        for k in range(self.kernel_volume):
            q = encode(coords + offs[k])
            pos = np.searchsorted(skeys, q)
            pos_c = np.minimum(pos, N - 1)
            hit = skeys[pos_c] == q
            idx_map[k] = np.where(hit, order[pos_c], N).astype(np.int32)
        return idx_map

    def __call__(self, feats: jax.Array, coords_np: np.ndarray,
                 *, tn: int = 2048) -> jax.Array:
        N, cin = feats.shape
        cout = self.out_channels
        assert cin == self.in_channels
        assert self.stride == (1, 1, 1), "only stride=1 submanifold path"

        if N == 0:  # empty point cloud: avoid a zero-step grid
            return jnp.zeros((0, cout), self.out_dtype)

        W = self.kernel
        if W.ndim == 2:
            W = W[None]  # kernel_volume == 1 case
        K = self.kernel_volume

        kc = K * cin
        kc_pad = _round_up(kc, 128)              # 216 -> 256 for 3^3 x Cin=8
        cout_pad = _round_up(cout, 128)          # lane-dense output store
        tile = _pick_tile(N, tn)
        npad = _round_up(N, tile)

        # Fold the contraction-dim padding into the index map when Cin divides
        # the padded width: extra columns index the appended zero row, so the
        # gather emits the final [Npad, Kc_pad] operand directly.
        k_eff = kc_pad // cin if (kc_pad % cin == 0) else K

        idx_map = self._build_kmap(np.asarray(coords_np))        # [K, N]
        idx_pad = np.full((npad, k_eff), N, dtype=np.int32)      # pad/miss -> zero row
        idx_pad[:N, :K] = idx_map.T

        # bf16 BEFORE the gather: halves the dominant (K-inflated) HBM stream.
        feats_src = jnp.concatenate(
            [feats.astype(jnp.bfloat16),
             jnp.zeros((1, cin), jnp.bfloat16)], axis=0)         # [N+1, Cin]

        # Weights: k-major / cin-minor to match the gathered layout; pad the K
        # axis to k_eff (zero weights hit the zero row anyway), pad Cout.
        w = W
        if k_eff > K:
            w = jnp.concatenate(
                [w, jnp.zeros((k_eff - K, cin, cout), w.dtype)], axis=0)
        w = w.reshape(k_eff * cin, cout)
        w = jnp.pad(w, ((0, kc_pad - k_eff * cin), (0, cout_pad - cout)))
        w = w.astype(jnp.bfloat16)

        b = self.bias if self.bias is not None else jnp.zeros((cout,), jnp.float32)
        b_row = jnp.pad(b, (0, cout_pad - cout)).reshape(1, cout_pad).astype(jnp.float32)

        out_pad = _gather_matmul(feats_src, jnp.asarray(idx_pad), w, b_row,
                                 tn=tile, out_dtype=self.out_dtype)
        return out_pad[:N, :cout]


# ----------------------------------------------------------------------------
if __name__ == "__main__":
    key = jax.random.PRNGKey(0)
    k_coords, k_feats, k_params = jax.random.split(key, 3)

    in_channels, out_channels = 8, 16
    batch, spatial = 2, 16

    # deterministic sparse voxel set: [N, 4] = (batch, x, y, z), unique coords
    raw = np.array(jax.random.randint(
        k_coords, (400, 4), 0, spatial, dtype=jnp.int32))   # writable copy
    raw[:, 0] = raw[:, 0] % batch
    coords_np = np.unique(raw, axis=0)
    N = coords_np.shape[0]

    feats = jax.random.normal(k_feats, (N, in_channels), jnp.float32)

    # bias=False path (module default)
    conv = Conv3dPallas(in_channels, out_channels, kernel_size=3, stride=1,
                        dilation=1, bias=False, key=k_params)
    out = jax.block_until_ready(conv(feats, coords_np))

    # bias=True path (same kernel weights: same key split)
    conv_b = Conv3dPallas(in_channels, out_channels, kernel_size=3, stride=1,
                          dilation=1, bias=True, key=k_params)
    out_b = jax.block_until_ready(conv_b(feats, coords_np))

    # pure-JAX f32 reference for the same gather + per-offset matmul semantics
    idx_map = conv._build_kmap(coords_np)
    feats_src = jnp.concatenate([feats, jnp.zeros((1, in_channels))], axis=0)
    g_ref = jnp.take(feats_src, jnp.asarray(idx_map), axis=0)   # [K, N, Cin]
    ref = jnp.einsum("knc,kcd->nd", g_ref, conv.kernel)
    ref_b = ref + conv_b.bias[None, :]

    assert out.shape == (N, out_channels)
    assert out_b.shape == (N, out_channels)
    # bf16 matmul operands + bf16 output with f32 accumulation -> loose tolerance
    assert np.allclose(np.asarray(out.astype(jnp.float32)), np.asarray(ref),
                       atol=3e-2, rtol=3e-2)
    assert np.allclose(np.asarray(out_b.astype(jnp.float32)), np.asarray(ref_b),
                       atol=3e-2, rtol=3e-2)
    print("KERNEL_OK")
</pallas_src>

<mosaic_0001>
module attributes {stable_mosaic.version = 11 : i64} {
  func.func @_sparse_conv_kernel(%arg0: i32, %arg1: memref<256x256xbf16, #tpu.memory_space<vmem>>, %arg2: memref<256x128xbf16, #tpu.memory_space<vmem>>, %arg3: memref<1x128xf32, #tpu.memory_space<vmem>>, %arg4: memref<256x128xbf16, #tpu.memory_space<vmem>>) attributes {dimension_semantics = [#tpu.dimension_semantics<parallel>], iteration_bounds = array<i64: 2>, scalar_prefetch = 0 : i64, scratch_operands = 0 : i64, tpu.core_type = #tpu.core_type<tc>, window_params = [{transform_indices = @transform_0, window_bounds = array<i64: 256, 256>}, {pipeline_mode = #tpu.pipeline_mode<synchronous>, transform_indices = @transform_1, window_bounds = array<i64: 256, 128>}, {pipeline_mode = #tpu.pipeline_mode<synchronous>, transform_indices = @transform_2, window_bounds = array<i64: 1, 128>}, {transform_indices = @transform_3, window_bounds = array<i64: 256, 128>}]} {
    %c0 = arith.constant 0 : index
    %c0_0 = arith.constant 0 : index
    %0 = vector.load %arg1[%c0, %c0_0] : memref<256x256xbf16, #tpu.memory_space<vmem>>, vector<256x256xbf16>
    %c0_1 = arith.constant 0 : index
    %c0_2 = arith.constant 0 : index
    %1 = vector.load %arg2[%c0_1, %c0_2] : memref<256x128xbf16, #tpu.memory_space<vmem>>, vector<256x128xbf16>
    %cst = arith.constant dense<0.000000e+00> : vector<256x128xf32>
    %2 = tpu.matmul %0, %1, %cst {dimension_numbers = #tpu.dot_dimension_numbers<[1], [0], [0], [1], [0, 0, 1, 1], [], []>} : vector<256x256xbf16>, vector<256x128xbf16>, vector<256x128xf32> -> vector<256x128xf32>
    %c0_3 = arith.constant 0 : index
    %c0_4 = arith.constant 0 : index
    %3 = vector.load %arg3[%c0_3, %c0_4] : memref<1x128xf32, #tpu.memory_space<vmem>>, vector<1x128xf32>
    %4 = vector.broadcast %3 : vector<1x128xf32> to vector<256x128xf32>
    %5 = arith.addf %2, %4 : vector<256x128xf32>
    %6 = arith.truncf %5 : vector<256x128xf32> to vector<256x128xbf16>
    %c0_5 = arith.constant 0 : index
    %c0_6 = arith.constant 0 : index
    %7 = vector.load %arg4[%c0_5, %c0_6] : memref<256x128xbf16, #tpu.memory_space<vmem>>, vector<256x128xbf16>
    tpu.vector_store %arg4[%c0_5, %c0_6], %6 {strides = array<i32>} : memref<256x128xbf16, #tpu.memory_space<vmem>>, vector<256x128xbf16>,
    return
  }
  func.func @transform_0(%arg0: i32) -> (i32, i32) {
    %c0_i32 = arith.constant 0 : i32
    %c0_i32_0 = arith.constant 0 : i32
    return %arg0, %c0_i32 : i32, i32
  }
  func.func @transform_1(%arg0: i32) -> (i32, i32) {
    %c0_i32 = arith.constant 0 : i32
    %c0_i32_0 = arith.constant 0 : i32
    %c0_i32_1 = arith.constant 0 : i32
    return %c0_i32, %c0_i32_0 : i32, i32
  }
  func.func @transform_2(%arg0: i32) -> (i32, i32) {
    %c0_i32 = arith.constant 0 : i32
    %c0_i32_0 = arith.constant 0 : i32
    %c0_i32_1 = arith.constant 0 : i32
    return %c0_i32, %c0_i32_0 : i32, i32
  }
  func.func @transform_3(%arg0: i32) -> (i32, i32) {
    %c0_i32 = arith.constant 0 : i32
    %c0_i32_0 = arith.constant 0 : i32
    return %arg0, %c0_i32 : i32, i32
  }
}

</mosaic_0001>

<llo_original>
// kernel: _gather_matmul.1
$region0: #{_gather_matmul.1}
  #allocation0 [shape = 'u32[]', space=smem, size = 0x4, offset = 0x4, fixed_abs, tag = 'smem constant byte address 0x4 - core index']
  #allocation1 [shape = 'u32[144,128]{1,0:T(1,128)}', space=vmem, size = 0x12000, scoped, tag = 'internal scratch']
  %s0 = inlined_call_operand.vmem [shape: bf16[512,256], index: 0, kind: input, shape index: {}]
  %s1 = inlined_call_operand.vmem [shape: bf16[256,128], index: 1, kind: input, shape index: {}]
  %s2 = inlined_call_operand.vmem [shape: f32[1,128], index: 2, kind: input, shape index: {}]
  %s3 = inlined_call_operand.hbm [shape: bf16[512,128], index: 3, kind: output, shape index: {}]
  %s4 = sld [smem:[#allocation0]]
  $region45: #{_gather_matmul.1} parent=0
    _
  %s6 = ssub.s32 1, %s4
  %s7 = scalar_select 0, %s6, %s4
  $region1: #{_gather_matmul.1} parent=0
    #allocation2 [shape = 'u8[131072]{0}', space=vmem, size = 0x20000, scoped, tag = 'output window, operand 0']
    #allocation3 [shape = 's32[2]{0}', space=sflag, size = 0x8, scoped, tag = 'scoped memory for _gather_matmul.1']
    %8 = vsyncpa [#allocation3], 0
    %s9 = scalar_lea.sflag [#allocation3], 1
    %10 = vsyncpa %s9, 0
    loop: start=0, step=1, limit=4
    $region2: #{_gather_matmul.1} parent=1 // loop_pre_header
      _
    $region3: #{_gather_matmul.1} parent=1 // loop_header
      %s12 = sphi 0, %s16
      %p13 = scmp.ge.s32.totalorder %s12, 4
      %s22 = sphi 0, %s24
      %s25 = sphi 0, %s22
      %s26 = sphi 0, %s25
      %s42 = sphi 0, %s26
      %s46 = sphi 0, %s46
      %s48 = sphi 0, %s46
      %s49 = sphi 0, %s48
      %s63 = sphi 0, %s49
      %s67 = sphi 0, %s67
      %s69 = sphi 0, %s67
      %s70 = sphi 0, %s69
      %s84 = sphi 0, %s70
      %s90 = sphi 0, %s92
      %s93 = sphi 0, %s90
      %s94 = sphi 0, %s93
      %s110 = sphi 0, %s94
    $region4: #{_gather_matmul.1} parent=1 // loop_header_branch
      %15 = sbr.rel (%p13) target = $region8
    $region5: #{_gather_matmul.1} parent=1 // loop_body
      %s17 = ssub.s32 %s12, 1
      %s18 = ssub.s32 %s12, 2
      %s19 = sadd.s32 %s12, 1
      %s20 = ssub.s32 %s12, %s19
      %p21 = scmp.eq.s32.totalorder %s20, 0
      %s23 = sadd.s32 %s22, 1
      %s24 = scalar_select %p21, %s22, %s23
      %p27 = pneg %p21
      %p28 = scmp.eq.s32.totalorder %s12, 1
      %p29 = por %p27, %p28
      %p30 = scmp.ne.s32.totalorder %s22, %s25
      %p31 = scmp.eq.s32.totalorder %s12, 0
      %p32 = por %p30, %p31
      %p33 = scmp.ne.s32.totalorder %s22, %s25
      %p34 = scmp.eq.s32.totalorder %s17, 1
      %p35 = por %p33, %p34
      %p36 = scmp.ne.s32.totalorder %s25, %s26
      %p37 = scmp.eq.s32.totalorder %s17, 0
      %p38 = por %p36, %p37
      %p39 = scmp.ne.s32.totalorder %s25, %s26
      %p40 = scmp.eq.s32.totalorder %s18, 1
      %p41 = por %p39, %p40
      %p43 = scmp.ne.s32.totalorder %s26, %s42
      %p44 = scmp.eq.s32.totalorder %s18, 0
      %p45 = por %p43, %p44
      %s47 = sadd.s32 %s46, 1
      %p50 = scmp.eq.s32.totalorder %s12, 1
      %p51 = scmp.ne.s32.totalorder %s46, %s48
      %p52 = scmp.eq.s32.totalorder %s12, 0
      %p53 = por %p51, %p52
      %p54 = scmp.ne.s32.totalorder %s46, %s48
      %p55 = scmp.eq.s32.totalorder %s17, 1
      %p56 = por %p54, %p55
      %p57 = scmp.ne.s32.totalorder %s48, %s49
      %p58 = scmp.eq.s32.totalorder %s17, 0
      %p59 = por %p57, %p58
      %p60 = scmp.ne.s32.totalorder %s48, %s49
      %p61 = scmp.eq.s32.totalorder %s18, 1
      %p62 = por %p60, %p61
      %p64 = scmp.ne.s32.totalorder %s49, %s63
      %p65 = scmp.eq.s32.totalorder %s18, 0
      %p66 = por %p64, %p65
      %s68 = sadd.s32 %s67, 1
      %p71 = scmp.eq.s32.totalorder %s12, 1
      %p72 = scmp.ne.s32.totalorder %s67, %s69
      %p73 = scmp.eq.s32.totalorder %s12, 0
      %p74 = por %p72, %p73
      %p75 = scmp.ne.s32.totalorder %s67, %s69
      %p76 = scmp.eq.s32.totalorder %s17, 1
      %p77 = por %p75, %p76
      %p78 = scmp.ne.s32.totalorder %s69, %s70
      %p79 = scmp.eq.s32.totalorder %s17, 0
      %p80 = por %p78, %p79
      %p81 = scmp.ne.s32.totalorder %s69, %s70
      %p82 = scmp.eq.s32.totalorder %s18, 1
      %p83 = por %p81, %p82
      %p85 = scmp.ne.s32.totalorder %s70, %s84
      %p86 = scmp.eq.s32.totalorder %s18, 0
      %p87 = por %p85, %p86
      %s88 = ssub.s32 %s12, %s19
      %p89 = scmp.eq.s32.totalorder %s88, 0
      %s91 = sadd.s32 %s90, 1
      %s92 = scalar_select %p89, %s90, %s91
      %p95 = pneg %p89
      %p96 = scmp.eq.s32.totalorder %s12, 1
      %p97 = por %p95, %p96
      %p98 = scmp.ne.s32.totalorder %s90, %s93
      %p99 = scmp.eq.s32.totalorder %s12, 0
      %p100 = por %p98, %p99
      %p101 = scmp.ne.s32.totalorder %s90, %s93
      %p102 = scmp.eq.s32.totalorder %s17, 1
      %p103 = por %p101, %p102
      %p104 = scmp.ne.s32.totalorder %s93, %s94
      %p105 = scmp.eq.s32.totalorder %s17, 0
      %p106 = por %p104, %p105
      %p107 = scmp.ne.s32.totalorder %s93, %s94
      %p108 = scmp.eq.s32.totalorder %s18, 1
      %p109 = por %p107, %p108
      %p111 = scmp.ne.s32.totalorder %s94, %s110
      %p112 = scmp.eq.s32.totalorder %s18, 0
      %p113 = por %p111, %p112
      %p114 = scmp.le.s32.totalorder 1, %s12
      %p115 = scmp.lt.s32.totalorder %s12, 3
      %p116 = pnand %p114, %p115
      %p117 = pneg %p116
      // Predicated region
      $region9: #{_gather_matmul.1} parent=5 // pred_check
        _
      $region10: #{_gather_matmul.1} parent=5 // pred_check_branch
        %119 = sbr.rel (%p116) target = $region12
      $region11: #{_gather_matmul.1} parent=5 // pred_region
        %s120 = ssub.s32 %s12, 1
        // Predicated region
        $region13: #{_gather_matmul.1} parent=11 // pred_check
          %p121 = pneg %p59
        $region14: #{_gather_matmul.1} parent=11 // pred_check_branch
          %123 = sbr.rel (%p121) target = $region16
        $region15: #{_gather_matmul.1} parent=11 // pred_region
          _
        $region16: #{_gather_matmul.1} parent=11 // pred_fallthru
          _
        // Predicated region
        $region17: #{_gather_matmul.1} parent=11 // pred_check
          %p124 = pneg %p80
        $region18: #{_gather_matmul.1} parent=11 // pred_check_branch
          %126 = sbr.rel (%p124) target = $region20
        $region19: #{_gather_matmul.1} parent=11 // pred_region
          _
        $region20: #{_gather_matmul.1} parent=11 // pred_fallthru
          _
      $region12: #{_gather_matmul.1} parent=5 // pred_fallthru
        _
      %p127 = scmp.lt.s32.totalorder %s12, 2
      // Predicated region
      $region21: #{_gather_matmul.1} parent=5 // pred_check
        %p128 = pneg %p127
      $region22: #{_gather_matmul.1} parent=5 // pred_check_branch
        %130 = sbr.rel (%p128) target = $region24
      $region23: #{_gather_matmul.1} parent=5 // pred_region
        // Predicated region
        $region25: #{_gather_matmul.1} parent=23 // pred_check
          %p131 = pneg %p32
        $region26: #{_gather_matmul.1} parent=23 // pred_check_branch
          %133 = sbr.rel (%p131) target = $region28
        $region27: #{_gather_matmul.1} parent=23 // pred_region
          %s134 = smul.u32 32, %s12
          %p135 = scmp.lt.s32.totalorder %s134, 63
          %s136 = scalar_select %p135, %s134, 63
          %s137 = smul.addr %s136, 2
          %s138 = smul.addr %s137, 4
          %s139 = scalar_lea.vmem %s0, %s138
          %s140 = smul.u32 32, %s12
        $region28: #{_gather_matmul.1} parent=23 // pred_fallthru
          _
      $region24: #{_gather_matmul.1} parent=5 // pred_fallthru
        _
      %p141 = scmp.le.s32.totalorder 1, %s12
      %p142 = scmp.lt.s32.totalorder %s12, 3
      %p143 = pnand %p141, %p142
      %p144 = pneg %p143
      // Predicated region
      $region29: #{_gather_matmul.1} parent=5 // pred_check
        _
      $region30: #{_gather_matmul.1} parent=5 // pred_check_branch
        %146 = sbr.rel (%p143) target = $region32
      $region31: #{_gather_matmul.1} parent=5 // pred_region
        %s147 = ssub.s32 %s12, 1
        %s148 = smul.u32 32, %s17
        %p149 = scmp.lt.s32.totalorder %s148, 63
        %s150 = scalar_select %p149, %s148, 63
        %s151 = smul.addr %s150, 2
        %s152 = smul.addr %s151, 4
        %s153 = scalar_lea.vmem %s0, %s152
        %p154 = pneg %p38
        %p155 = pneg %p35
        %p156 = pneg %p59
        %p157 = pneg %p56
        %p158 = pneg %p80
        %p159 = pneg %p77
        %p160 = pneg %p106
        %p161 = pneg %p103
        %s162 = sand.u32 %s93, 1
        %s163 = scalar_lea.sflag [#allocation3], %s162
        %s164 = sand.u32 %s93, 1
        %s165 = smul.addr %s164, 128
        %s166 = scalar_lea.vmem [#allocation2], %s165
        %s167 = smul.u32 32, %s17
        %p168 = scmp.lt.s32.totalorder %s167, 63
        %s169 = scalar_select %p168, %s167, 63
        %s170 = smul.addr %s169, 2
        %s171 = smul.addr %s170, 4
        %s172 = scalar_lea.vmem %s0, %s171
        %s173 = smul.u32 32, %s17
        %s174 = smul.u32 32, %s17
        %v176 = vld [vmem:[%s172] sm:$0xff]
        %v177 = vld [vmem:[%s172 + $0x8] sm:$0xff]
        %v178 = vld [vmem:[%s172 + $0x10] sm:$0xff]
        %v179 = vld [vmem:[%s172 + $0x18] sm:$0xff]
        %v180 = vld [vmem:[%s172 + $0x20] sm:$0xff]
        %v181 = vld [vmem:[%s172 + $0x28] sm:$0xff]
        %v182 = vld [vmem:[%s172 + $0x30] sm:$0xff]
        %v183 = vld [vmem:[%s172 + $0x38] sm:$0xff]
        %v184 = vld [vmem:[%s172 + $0x40] sm:$0xff]
        %v185 = vld [vmem:[%s172 + $0x48] sm:$0xff]
        %v186 = vld [vmem:[%s172 + $0x50] sm:$0xff]
        %v187 = vld [vmem:[%s172 + $0x58] sm:$0xff]
        %v188 = vld [vmem:[%s172 + $0x60] sm:$0xff]
        %v189 = vld [vmem:[%s172 + $0x68] sm:$0xff]
        %v190 = vld [vmem:[%s172 + $0x70] sm:$0xff]
        %v191 = vld [vmem:[%s172 + $0x78] sm:$0xff]
        %v192 = vld [vmem:[%s172 + $0x80] sm:$0xff]
        %v193 = vld [vmem:[%s172 + $0x88] sm:$0xff]
        %v194 = vld [vmem:[%s172 + $0x90] sm:$0xff]
        %v195 = vld [vmem:[%s172 + $0x98] sm:$0xff]
        %v196 = vld [vmem:[%s172 + $0xa0] sm:$0xff]
        %v197 = vld [vmem:[%s172 + $0xa8] sm:$0xff]
        %v198 = vld [vmem:[%s172 + $0xb0] sm:$0xff]
        %v199 = vld [vmem:[%s172 + $0xb8] sm:$0xff]
        %v200 = vld [vmem:[%s172 + $0xc0] sm:$0xff]
        %v201 = vld [vmem:[%s172 + $0xc8] sm:$0xff]
        %v202 = vld [vmem:[%s172 + $0xd0] sm:$0xff]
        %v203 = vld [vmem:[%s172 + $0xd8] sm:$0xff]
        %v204 = vld [vmem:[%s172 + $0xe0] sm:$0xff]
        %v205 = vld [vmem:[%s172 + $0xe8] sm:$0xff]
        %v206 = vld [vmem:[%s172 + $0xf0] sm:$0xff]
        %v207 = vld [vmem:[%s172 + $0xf8] sm:$0xff]
        %v208 = vld [vmem:[%s1] sm:$0xf]
        %v209 = vld [vmem:[%s1 + $0x4] sm:$0xf]
        %v210 = vld [vmem:[%s1 + $0x8] sm:$0xf]
        %v211 = vld [vmem:[%s1 + $0xc] sm:$0xf]
        %v212 = vld [vmem:[%s1 + $0x10] sm:$0xf]
        %v213 = vld [vmem:[%s1 + $0x14] sm:$0xf]
        %v214 = vld [vmem:[%s1 + $0x18] sm:$0xf]
        %v215 = vld [vmem:[%s1 + $0x1c] sm:$0xf]
        %v216 = vld [vmem:[%s1 + $0x20] sm:$0xf]
        %v217 = vld [vmem:[%s1 + $0x24] sm:$0xf]
        %v218 = vld [vmem:[%s1 + $0x28] sm:$0xf]
        %v219 = vld [vmem:[%s1 + $0x2c] sm:$0xf]
        %v220 = vld [vmem:[%s1 + $0x30] sm:$0xf]
        %v221 = vld [vmem:[%s1 + $0x34] sm:$0xf]
        %v222 = vld [vmem:[%s1 + $0x38] sm:$0xf]
        %v223 = vld [vmem:[%s1 + $0x3c] sm:$0xf]
        %v224 = vld [vmem:[%s1 + $0x40] sm:$0xf]
        %v225 = vld [vmem:[%s1 + $0x44] sm:$0xf]
        %v226 = vld [vmem:[%s1 + $0x48] sm:$0xf]
        %v227 = vld [vmem:[%s1 + $0x4c] sm:$0xf]
        %v228 = vld [vmem:[%s1 + $0x50] sm:$0xf]
        %v229 = vld [vmem:[%s1 + $0x54] sm:$0xf]
        %v230 = vld [vmem:[%s1 + $0x58] sm:$0xf]
        %v231 = vld [vmem:[%s1 + $0x5c] sm:$0xf]
        %v232 = vld [vmem:[%s1 + $0x60] sm:$0xf]
        %v233 = vld [vmem:[%s1 + $0x64] sm:$0xf]
        %v234 = vld [vmem:[%s1 + $0x68] sm:$0xf]
        %v235 = vld [vmem:[%s1 + $0x6c] sm:$0xf]
        %v236 = vld [vmem:[%s1 + $0x70] sm:$0xf]
        %v237 = vld [vmem:[%s1 + $0x74] sm:$0xf]
        %v238 = vld [vmem:[%s1 + $0x78] sm:$0xf]
        %v239 = vld [vmem:[%s1 + $0x7c] sm:$0xf]
        %v240 = vld [vmem:[%s2] sm:$0x1]
        %v242 = vlaneseq
        %v243 = vshrl.u32 %v242, 7
        %v244 = vsub.s32 0, %v243
        %v245 = vrot.slane %v240, %v244
        %v279 = vunpack.c.l.b16 %v176
        %v280 = vunpack.c.h.b16 %v176
        %v281 = vunpack.c.l.b16 %v177
        %v282 = vunpack.c.h.b16 %v177
        %v283 = vunpack.c.l.b16 %v178
        %v284 = vunpack.c.h.b16 %v178
        %v285 = vunpack.c.l.b16 %v179
        %v286 = vunpack.c.h.b16 %v179
        %v287 = vunpack.c.l.b16 %v180
        %v288 = vunpack.c.h.b16 %v180
        %v289 = vunpack.c.l.b16 %v181
        %v290 = vunpack.c.h.b16 %v181
        %v291 = vunpack.c.l.b16 %v182
        %v292 = vunpack.c.h.b16 %v182
        %v293 = vunpack.c.l.b16 %v183
        %v294 = vunpack.c.h.b16 %v183
        %v295 = vunpack.c.l.b16 %v184
        %v296 = vunpack.c.h.b16 %v184
        %v297 = vunpack.c.l.b16 %v185
        %v298 = vunpack.c.h.b16 %v185
        %v299 = vunpack.c.l.b16 %v186
        %v300 = vunpack.c.h.b16 %v186
        %v301 = vunpack.c.l.b16 %v187
        %v302 = vunpack.c.h.b16 %v187
        %v303 = vunpack.c.l.b16 %v188
        %v304 = vunpack.c.h.b16 %v188
        %v305 = vunpack.c.l.b16 %v189
        %v306 = vunpack.c.h.b16 %v189
        %v307 = vunpack.c.l.b16 %v190
        %v308 = vunpack.c.h.b16 %v190
        %v309 = vunpack.c.l.b16 %v191
        %v310 = vunpack.c.h.b16 %v191
        %v311 = vunpack.c.l.b16 %v192
        %v312 = vunpack.c.h.b16 %v192
        %v313 = vunpack.c.l.b16 %v193
        %v314 = vunpack.c.h.b16 %v193
        %v315 = vunpack.c.l.b16 %v194
        %v316 = vunpack.c.h.b16 %v194
        %v317 = vunpack.c.l.b16 %v195
        %v318 = vunpack.c.h.b16 %v195
        %v319 = vunpack.c.l.b16 %v196
        %v320 = vunpack.c.h.b16 %v196
        %v321 = vunpack.c.l.b16 %v197
        %v322 = vunpack.c.h.b16 %v197
        %v323 = vunpack.c.l.b16 %v198
        %v324 = vunpack.c.h.b16 %v198
        %v325 = vunpack.c.l.b16 %v199
        %v326 = vunpack.c.h.b16 %v199
        %v327 = vunpack.c.l.b16 %v200
        %v328 = vunpack.c.h.b16 %v200
        %v329 = vunpack.c.l.b16 %v201
        %v330 = vunpack.c.h.b16 %v201
        %v331 = vunpack.c.l.b16 %v202
        %v332 = vunpack.c.h.b16 %v202
        %v333 = vunpack.c.l.b16 %v203
        %v334 = vunpack.c.h.b16 %v203
        %v335 = vunpack.c.l.b16 %v204
        %v336 = vunpack.c.h.b16 %v204
        %v337 = vunpack.c.l.b16 %v205
        %v338 = vunpack.c.h.b16 %v205
        %v339 = vunpack.c.l.b16 %v206
        %v340 = vunpack.c.h.b16 %v206
        %v341 = vunpack.c.l.b16 %v207
        %v342 = vunpack.c.h.b16 %v207
        %v343 = vpack.c.b16 %v281, %v279
        %v344 = vpack.c.b16 %v282, %v280
        %v345 = vpack.c.b16 %v285, %v283
        %v346 = vpack.c.b16 %v286, %v284
        %v347 = vpack.c.b16 %v289, %v287
        %v348 = vpack.c.b16 %v290, %v288
        %v349 = vpack.c.b16 %v293, %v291
        %v350 = vpack.c.b16 %v294, %v292
        %v351 = vpack.c.b16 %v297, %v295
        %v352 = vpack.c.b16 %v298, %v296
        %v353 = vpack.c.b16 %v301, %v299
        %v354 = vpack.c.b16 %v302, %v300
        %v355 = vpack.c.b16 %v305, %v303
        %v356 = vpack.c.b16 %v306, %v304
        %v357 = vpack.c.b16 %v309, %v307
        %v358 = vpack.c.b16 %v310, %v308
        %v359 = vpack.c.b16 %v313, %v311
        %v360 = vpack.c.b16 %v314, %v312
        %v361 = vpack.c.b16 %v317, %v315
        %v362 = vpack.c.b16 %v318, %v316
        %v363 = vpack.c.b16 %v321, %v319
        %v364 = vpack.c.b16 %v322, %v320
        %v365 = vpack.c.b16 %v325, %v323
        %v366 = vpack.c.b16 %v326, %v324
        %v367 = vpack.c.b16 %v329, %v327
        %v368 = vpack.c.b16 %v330, %v328
        %v369 = vpack.c.b16 %v333, %v331
        %v370 = vpack.c.b16 %v334, %v332
        %v371 = vpack.c.b16 %v337, %v335
        %v372 = vpack.c.b16 %v338, %v336
        %v373 = vpack.c.b16 %v341, %v339
        %v374 = vpack.c.b16 %v342, %v340
        %v439 = vunpack.c.l.b16 %v208
        %v440 = vunpack.c.l.b16 %v209
        %v441 = vunpack.c.l.b16 %v210
        %v442 = vunpack.c.l.b16 %v211
        %v443 = vunpack.c.l.b16 %v212
        %v444 = vunpack.c.l.b16 %v213
        %v445 = vunpack.c.l.b16 %v214
        %v446 = vunpack.c.l.b16 %v215
        %v447 = vunpack.c.l.b16 %v216
        %v448 = vunpack.c.l.b16 %v217
        %v449 = vunpack.c.l.b16 %v218
        %v450 = vunpack.c.l.b16 %v219
        %v451 = vunpack.c.l.b16 %v220
        %v452 = vunpack.c.l.b16 %v221
        %v453 = vunpack.c.l.b16 %v222
        %v454 = vunpack.c.l.b16 %v223
        %v455 = vunpack.c.l.b16 %v224
        %v456 = vunpack.c.l.b16 %v225
        %v457 = vunpack.c.l.b16 %v226
        %v458 = vunpack.c.l.b16 %v227
        %v459 = vunpack.c.l.b16 %v228
        %v460 = vunpack.c.l.b16 %v229
        %v461 = vunpack.c.l.b16 %v230
        %v462 = vunpack.c.l.b16 %v231
        %v463 = vunpack.c.l.b16 %v232
        %v464 = vunpack.c.l.b16 %v233
        %v465 = vunpack.c.l.b16 %v234
        %v466 = vunpack.c.l.b16 %v235
        %v467 = vunpack.c.l.b16 %v236
        %v468 = vunpack.c.l.b16 %v237
        %v469 = vunpack.c.l.b16 %v238
        %v470 = vunpack.c.l.b16 %v239
        %v471 = vpack.c.b16 %v440, %v439
        %v472 = vpack.c.b16 %v442, %v441
        %v473 = vpack.c.b16 %v444, %v443
        %v474 = vpack.c.b16 %v446, %v445
        %v475 = vpack.c.b16 %v448, %v447
        %v476 = vpack.c.b16 %v450, %v449
        %v477 = vpack.c.b16 %v452, %v451
        %v478 = vpack.c.b16 %v454, %v453
        %v479 = vpack.c.b16 %v456, %v455
        %v480 = vpack.c.b16 %v458, %v457
        %v481 = vpack.c.b16 %v460, %v459
        %v482 = vpack.c.b16 %v462, %v461
        %v483 = vpack.c.b16 %v464, %v463
        %v484 = vpack.c.b16 %v466, %v465
        %v485 = vpack.c.b16 %v468, %v467
        %v486 = vpack.c.b16 %v470, %v469
        %503 = vmatprep.subr.bf16.mxu0 0
        %504 = vmatpush1.bf16.msra.mxu0 %v478
        %505 = vmatprep.subr.bf16.mxu0 0
        %506 = vmatpush1.bf16.msra.mxu0 %v477
        %507 = vmatprep.subr.bf16.mxu0 0
        %508 = vmatpush1.bf16.msra.mxu0 %v476
        %509 = vmatprep.subr.bf16.mxu0 0
        %510 = vmatpush1.bf16.msra.mxu0 %v475
        %511 = vmatprep.subr.bf16.mxu0 0
        %512 = vmatpush1.bf16.msra.mxu0 %v474
        %513 = vmatprep.subr.bf16.mxu0 0
        %514 = vmatpush1.bf16.msra.mxu0 %v473
        %515 = vmatprep.subr.bf16.mxu0 0
        %516 = vmatpush1.bf16.msra.mxu0 %v472
        %517 = vmatprep.subr.bf16.mxu0 0
        %518 = vmatpush1.bf16.msra.mxu0 %v471
        %519 = vmatprep.subr.bf16.mxu0 0
        %520 = vmatpush2.bf16.msra.mxu0 %v486
        %521 = vmatprep.subr.bf16.mxu0 0
        %522 = vmatpush2.bf16.msra.mxu0 %v485
        %523 = vmatprep.subr.bf16.mxu0 0
        %524 = vmatpush2.bf16.msra.mxu0 %v484
        %525 = vmatprep.subr.bf16.mxu0 0
        %526 = vmatpush2.bf16.msra.mxu0 %v483
        %527 = vmatprep.subr.bf16.mxu0 0
        %528 = vmatpush2.bf16.msra.mxu0 %v482
        %529 = vmatprep.subr.bf16.mxu0 0
        %530 = vmatpush2.bf16.msra.mxu0 %v481
        %531 = vmatprep.subr.bf16.mxu0 0
        %532 = vmatpush2.bf16.msra.mxu0 %v480
        %533 = vmatprep.subr.bf16.mxu0 0
        %534 = vmatpush2.bf16.msra.mxu0 %v479
        %535 = vmatprep.mubr.bf16.mxu0 %v344
        %536 = vmatmul.mubr.bf16.gmra.mxu0 %v343
        %v537 = vpop.f32.mrf.mxu0
        %v538 = vadd.f32 %v245, %v537
        %v539 = vpop.f32.mrf.mxu0
        %v540 = vpop.f32.mrf.mxu0
        %v541 = vadd.f32 %v245, %v540
        %v542 = vpop.f32.mrf.mxu0
        %543 = vmatprep.mubr.bf16.mxu0 %v346
        %544 = vmatmul.mubr.bf16.gmra.mxu0 %v345
        %v545 = vpop.f32.mrf.mxu0
        %v546 = vadd.f32 %v245, %v545
        %v547 = vpop.f32.mrf.mxu0
        %v548 = vpop.f32.mrf.mxu0
        %v549 = vadd.f32 %v245, %v548
        %v550 = vpop.f32.mrf.mxu0
        %551 = vmatprep.mubr.bf16.mxu0 %v348
        %552 = vmatmul.mubr.bf16.gmra.mxu0 %v347
        %v553 = vpop.f32.mrf.mxu0
        %v554 = vadd.f32 %v245, %v553
        %v555 = vpop.f32.mrf.mxu0
        %v556 = vpop.f32.mrf.mxu0
        %v557 = vadd.f32 %v245, %v556
        %v558 = vpop.f32.mrf.mxu0
        %559 = vmatprep.mubr.bf16.mxu0 %v350
        %560 = vmatmul.mubr.bf16.gmra.mxu0 %v349
        %v561 = vpop.f32.mrf.mxu0
        %v562 = vadd.f32 %v245, %v561
        %v563 = vpop.f32.mrf.mxu0
        %v564 = vpop.f32.mrf.mxu0
        %v565 = vadd.f32 %v245, %v564
        %v566 = vpop.f32.mrf.mxu0
        %567 = vmatprep.mubr.bf16.mxu0 %v352
        %568 = vmatmul.mubr.bf16.gmra.mxu0 %v351
        %v569 = vpop.f32.mrf.mxu0
        %v570 = vadd.f32 %v245, %v569
        %v571 = vpop.f32.mrf.mxu0
        %v572 = vpop.f32.mrf.mxu0
        %v573 = vadd.f32 %v245, %v572
        %v574 = vpop.f32.mrf.mxu0
        %575 = vmatprep.mubr.bf16.mxu0 %v354
        %576 = vmatmul.mubr.bf16.gmra.mxu0 %v353
        %v577 = vpop.f32.mrf.mxu0
        %v578 = vadd.f32 %v245, %v577
        %v579 = vpop.f32.mrf.mxu0
        %v580 = vpop.f32.mrf.mxu0
        %v581 = vadd.f32 %v245, %v580
        %v582 = vpop.f32.mrf.mxu0
        %583 = vmatprep.mubr.bf16.mxu0 %v356
        %584 = vmatmul.mubr.bf16.gmra.mxu0 %v355
        %v585 = vpop.f32.mrf.mxu0
        %v586 = vadd.f32 %v245, %v585
        %v587 = vpop.f32.mrf.mxu0
        %v588 = vpop.f32.mrf.mxu0
        %v589 = vadd.f32 %v245, %v588
        %v590 = vpop.f32.mrf.mxu0
        %591 = vmatprep.mubr.bf16.mxu0 %v358
        %592 = vmatmul.mubr.bf16.gmra.mxu0 %v357
        %v593 = vpop.f32.mrf.mxu0
        %v594 = vadd.f32 %v245, %v593
        %v595 = vpop.f32.mrf.mxu0
        %v596 = vpop.f32.mrf.mxu0
        %v597 = vadd.f32 %v245, %v596
        %v598 = vpop.f32.mrf.mxu0
        %599 = vmatprep.mubr.bf16.mxu0 %v360
        %600 = vmatmul.mubr.bf16.gmra.mxu0 %v359
        %v601 = vpop.f32.mrf.mxu0
        %v602 = vadd.f32 %v245, %v601
        %v603 = vpop.f32.mrf.mxu0
        %v604 = vpop.f32.mrf.mxu0
        %v605 = vadd.f32 %v245, %v604
        %v606 = vpop.f32.mrf.mxu0
        %607 = vmatprep.mubr.bf16.mxu0 %v362
        %608 = vmatmul.mubr.bf16.gmra.mxu0 %v361
        %v609 = vpop.f32.mrf.mxu0
        %v610 = vadd.f32 %v245, %v609
        %v611 = vpop.f32.mrf.mxu0
        %v612 = vpop.f32.mrf.mxu0
        %v613 = vadd.f32 %v245, %v612
        %v614 = vpop.f32.mrf.mxu0
        %615 = vmatprep.mubr.bf16.mxu0 %v364
        %616 = vmatmul.mubr.bf16.gmra.mxu0 %v363
        %v617 = vpop.f32.mrf.mxu0
        %v618 = vadd.f32 %v245, %v617
        %v619 = vpop.f32.mrf.mxu0
        %v620 = vpop.f32.mrf.mxu0
        %v621 = vadd.f32 %v245, %v620
        %v622 = vpop.f32.mrf.mxu0
        %623 = vmatprep.mubr.bf16.mxu0 %v366
        %624 = vmatmul.mubr.bf16.gmra.mxu0 %v365
        %v625 = vpop.f32.mrf.mxu0
        %v626 = vadd.f32 %v245, %v625
        %v627 = vpop.f32.mrf.mxu0
        %v628 = vpop.f32.mrf.mxu0
        %v629 = vadd.f32 %v245, %v628
        %v630 = vpop.f32.mrf.mxu0
        %631 = vmatprep.mubr.bf16.mxu0 %v368
        %632 = vmatmul.mubr.bf16.gmra.mxu0 %v367
        %v633 = vpop.f32.mrf.mxu0
        %v634 = vadd.f32 %v245, %v633
        %v635 = vpop.f32.mrf.mxu0
        %v636 = vpop.f32.mrf.mxu0
        %v637 = vadd.f32 %v245, %v636
        %v638 = vpop.f32.mrf.mxu0
        %639 = vmatprep.mubr.bf16.mxu0 %v370
        %640 = vmatmul.mubr.bf16.gmra.mxu0 %v369
        %v641 = vpop.f32.mrf.mxu0
        %v642 = vadd.f32 %v245, %v641
        %v643 = vpop.f32.mrf.mxu0
        %v644 = vpop.f32.mrf.mxu0
        %v645 = vadd.f32 %v245, %v644
        %v646 = vpop.f32.mrf.mxu0
        %647 = vmatprep.mubr.bf16.mxu0 %v372
        %648 = vmatmul.mubr.bf16.gmra.mxu0 %v371
        %v649 = vpop.f32.mrf.mxu0
        %v650 = vadd.f32 %v245, %v649
        %v651 = vpop.f32.mrf.mxu0
        %v652 = vpop.f32.mrf.mxu0
        %v653 = vadd.f32 %v245, %v652
        %v654 = vpop.f32.mrf.mxu0
        %655 = vmatprep.mubr.bf16.mxu0 %v374
        %656 = vmatmul.mubr.bf16.gmra.mxu0 %v373
        %v657 = vpop.f32.mrf.mxu0
        %v658 = vadd.f32 %v245, %v657
        %v659 = vpop.f32.mrf.mxu0
        %v660 = vpop.f32.mrf.mxu0
        %v661 = vadd.f32 %v245, %v660
        %v662 = vpop.f32.mrf.mxu0
        %663 = vdwg.mxu0
        %v664 = vpack.c.bf16 %v541, %v538
        %v665 = vpack.c.bf16 %v549, %v546
        %v666 = vpack.c.bf16 %v557, %v554
        %v667 = vpack.c.bf16 %v565, %v562
        %v668 = vpack.c.bf16 %v573, %v570
        %v669 = vpack.c.bf16 %v581, %v578
        %v670 = vpack.c.bf16 %v589, %v586
        %v671 = vpack.c.bf16 %v597, %v594
        %v672 = vpack.c.bf16 %v605, %v602
        %v673 = vpack.c.bf16 %v613, %v610
        %v674 = vpack.c.bf16 %v621, %v618
        %v675 = vpack.c.bf16 %v629, %v626
        %v676 = vpack.c.bf16 %v637, %v634
        %v677 = vpack.c.bf16 %v645, %v642
        %v678 = vpack.c.bf16 %v653, %v650
        %v679 = vpack.c.bf16 %v661, %v658
        %v696 = vunpack.c.l.b16 %v664
        %v697 = vunpack.c.h.b16 %v664
        %v698 = vunpack.c.l.b16 %v665
        %v699 = vunpack.c.h.b16 %v665
        %v700 = vunpack.c.l.b16 %v666
        %v701 = vunpack.c.h.b16 %v666
        %v702 = vunpack.c.l.b16 %v667
        %v703 = vunpack.c.h.b16 %v667
        %v704 = vunpack.c.l.b16 %v668
        %v705 = vunpack.c.h.b16 %v668
        %v706 = vunpack.c.l.b16 %v669
        %v707 = vunpack.c.h.b16 %v669
        %v708 = vunpack.c.l.b16 %v670
        %v709 = vunpack.c.h.b16 %v670
        %v710 = vunpack.c.l.b16 %v671
        %v711 = vunpack.c.h.b16 %v671
        %v712 = vunpack.c.l.b16 %v672
        %v713 = vunpack.c.h.b16 %v672
        %v714 = vunpack.c.l.b16 %v673
        %v715 = vunpack.c.h.b16 %v673
        %v716 = vunpack.c.l.b16 %v674
        %v717 = vunpack.c.h.b16 %v674
        %v718 = vunpack.c.l.b16 %v675
        %v719 = vunpack.c.h.b16 %v675
        %v720 = vunpack.c.l.b16 %v676
        %v721 = vunpack.c.h.b16 %v676
        %v722 = vunpack.c.l.b16 %v677
        %v723 = vunpack.c.h.b16 %v677
        %v724 = vunpack.c.l.b16 %v678
        %v725 = vunpack.c.h.b16 %v678
        %v726 = vunpack.c.l.b16 %v679
        %v727 = vunpack.c.h.b16 %v679
        %v728 = vpack.c.b16 %v696, %v696
        %v729 = vpack.c.b16 %v697, %v697
        %v730 = vpack.c.b16 %v698, %v698
        %v731 = vpack.c.b16 %v699, %v699
        %v732 = vpack.c.b16 %v700, %v700
        %v733 = vpack.c.b16 %v701, %v701
        %v734 = vpack.c.b16 %v702, %v702
        %v735 = vpack.c.b16 %v703, %v703
        %v736 = vpack.c.b16 %v704, %v704
        %v737 = vpack.c.b16 %v705, %v705
        %v738 = vpack.c.b16 %v706, %v706
        %v739 = vpack.c.b16 %v707, %v707
        %v740 = vpack.c.b16 %v708, %v708
        %v741 = vpack.c.b16 %v709, %v709
        %v742 = vpack.c.b16 %v710, %v710
        %v743 = vpack.c.b16 %v711, %v711
        %v744 = vpack.c.b16 %v712, %v712
        %v745 = vpack.c.b16 %v713, %v713
        %v746 = vpack.c.b16 %v714, %v714
        %v747 = vpack.c.b16 %v715, %v715
        %v748 = vpack.c.b16 %v716, %v716
        %v749 = vpack.c.b16 %v717, %v717
        %v750 = vpack.c.b16 %v718, %v718
        %v751 = vpack.c.b16 %v719, %v719
        %v752 = vpack.c.b16 %v720, %v720
        %v753 = vpack.c.b16 %v721, %v721
        %v754 = vpack.c.b16 %v722, %v722
        %v755 = vpack.c.b16 %v723, %v723
        %v756 = vpack.c.b16 %v724, %v724
        %v757 = vpack.c.b16 %v725, %v725
        %v758 = vpack.c.b16 %v726, %v726
        %v759 = vpack.c.b16 %v727, %v727
        %792 = vst [vmem:[%s166] sm:$0xf] %v728
        %793 = vst [vmem:[%s166 + $0x4] sm:$0xf] %v729
        %794 = vst [vmem:[%s166 + $0x8] sm:$0xf] %v730
        %795 = vst [vmem:[%s166 + $0xc] sm:$0xf] %v731
        %796 = vst [vmem:[%s166 + $0x10] sm:$0xf] %v732
        %797 = vst [vmem:[%s166 + $0x14] sm:$0xf] %v733
        %798 = vst [vmem:[%s166 + $0x18] sm:$0xf] %v734
        %799 = vst [vmem:[%s166 + $0x1c] sm:$0xf] %v735
        %800 = vst [vmem:[%s166 + $0x20] sm:$0xf] %v736
        %801 = vst [vmem:[%s166 + $0x24] sm:$0xf] %v737
        %802 = vst [vmem:[%s166 + $0x28] sm:$0xf] %v738
        %803 = vst [vmem:[%s166 + $0x2c] sm:$0xf] %v739
        %804 = vst [vmem:[%s166 + $0x30] sm:$0xf] %v740
        %805 = vst [vmem:[%s166 + $0x34] sm:$0xf] %v741
        %806 = vst [vmem:[%s166 + $0x38] sm:$0xf] %v742
        %807 = vst [vmem:[%s166 + $0x3c] sm:$0xf] %v743
        %808 = vst [vmem:[%s166 + $0x40] sm:$0xf] %v744
        %809 = vst [vmem:[%s166 + $0x44] sm:$0xf] %v745
        %810 = vst [vmem:[%s166 + $0x48] sm:$0xf] %v746
        %811 = vst [vmem:[%s166 + $0x4c] sm:$0xf] %v747
        %812 = vst [vmem:[%s166 + $0x50] sm:$0xf] %v748
        %813 = vst [vmem:[%s166 + $0x54] sm:$0xf] %v749
        %814 = vst [vmem:[%s166 + $0x58] sm:$0xf] %v750
        %815 = vst [vmem:[%s166 + $0x5c] sm:$0xf] %v751
        %816 = vst [vmem:[%s166 + $0x60] sm:$0xf] %v752
        %817 = vst [vmem:[%s166 + $0x64] sm:$0xf] %v753
        %818 = vst [vmem:[%s166 + $0x68] sm:$0xf] %v754
        %819 = vst [vmem:[%s166 + $0x6c] sm:$0xf] %v755
        %820 = vst [vmem:[%s166 + $0x70] sm:$0xf] %v756
        %821 = vst [vmem:[%s166 + $0x74] sm:$0xf] %v757
        %822 = vst [vmem:[%s166 + $0x78] sm:$0xf] %v758
        %823 = vst [vmem:[%s166 + $0x7c] sm:$0xf] %v759
        %s824 = sand.u32 %s93, 1
        %s825 = scalar_lea.sflag [#allocation3], %s824
        %s826 = sand.u32 %s93, 1
        %s827 = smul.addr %s826, 128
        %s828 = scalar_lea.vmem [#allocation2], %s827
        // Predicated region
        $region33: #{_gather_matmul.1} parent=31 // pred_check
          %p829 = pneg %p103
        $region34: #{_gather_matmul.1} parent=31 // pred_check_branch
          %831 = sbr.rel (%p829) target = $region36
        $region35: #{_gather_matmul.1} parent=31 // pred_region
          %s832 = smul.u32 32, %s17
          %s834 = ssub.s32 2048, 2048
          %835 = vsyncadd %s825, %s834
          %s836 = smul.addr %s832, 64
          %s837 = scalar_lea.hbm %s3, %s836
          %s838 = sshll.u32 %s828, 4
          %s839 = int_to_ptr.vmem [resolvable:$true] %s838
          %844 = dma.vmem_to_hbm [thread:$0]  %s839, 2048, %s837, %s825, 64, 64, 4
        $region36: #{_gather_matmul.1} parent=31 // pred_fallthru
          _
      $region32: #{_gather_matmul.1} parent=5 // pred_fallthru
        _
      %p845 = scmp.le.s32.totalorder 2, %s12
      // Predicated region
      $region37: #{_gather_matmul.1} parent=5 // pred_check
        %p846 = pneg %p845
      $region38: #{_gather_matmul.1} parent=5 // pred_check_branch
        %848 = sbr.rel (%p846) target = $region40
      $region39: #{_gather_matmul.1} parent=5 // pred_region
        %s849 = ssub.s32 %s12, 2
        // Predicated region
        $region41: #{_gather_matmul.1} parent=39 // pred_check
          %p850 = pneg %p109
        $region42: #{_gather_matmul.1} parent=39 // pred_check_branch
          %852 = sbr.rel (%p850) target = $region44
        $region43: #{_gather_matmul.1} parent=39 // pred_region
          %s853 = sand.u32 %s94, 1
          %s854 = scalar_lea.sflag [#allocation3], %s853
          %s855 = sand.u32 %s94, 1
          %s856 = smul.addr %s855, 128
          %s857 = scalar_lea.vmem [#allocation2], %s856
          %858 = dma.done %s854, 2048
        $region44: #{_gather_matmul.1} parent=39 // pred_fallthru
          _
      $region40: #{_gather_matmul.1} parent=5 // pred_fallthru
        _
    $region6: #{_gather_matmul.1} parent=1 // loop_footer
      %s16 = sadd.s32 1, %s12
    $region7: #{_gather_matmul.1} parent=1 // loop_footer_branch
      %11 = sbr.rel target = $region3
    $region8: #{_gather_matmul.1} parent=1 // loop_exit
      _
    %859 = vsyncpa [#allocation3], 1
    %s860 = scalar_lea.sflag [#allocation3], 1
    %861 = vsyncpa %s860, 1

</llo_original>
